<compile_context>
chip_gen: v6e
topology: v6e:2x2x1
jax: 0.10.0
libtpu: 0.0.40
codegen_flags: <defaults>
</compile_context>

<pallas_src>
import jax
import jax.numpy as jnp
from jax.experimental import pallas as pl
from jax.experimental.pallas import tpu as pltpu

SIGMA = 1.0


def drift_objective(t_samples, x0, x1, xc, y, z, params, sigma=SIGMA):
    """Scalar MC estimate of the drift objective (mean MSE over MC samples)."""
    w1x, w1c, w1y, w1t, b1, w2, b2 = params
    num_mc = int(t_samples.shape[0])
    B, D = x0.shape
    DY = y.shape[1]
    H = w1x.shape[1]
    K1 = 2 * D + DY                          # packed layer-1 contraction dim: [x | c | y]
    inv_norm = 1.0 / float(num_mc * B * D)   # mean over MC samples and (B, D) elements

    # ---------------- wrapper-side operand packing (2 VMEM DMAs + SMEM scalars) ----------------
    # X slab rows: [x0|0|0 ; x1|0|0 ; z|0|0 ; 0|xc|y]  -> [4B, K1]
    zeros_cy = jnp.zeros((B, D + DY), jnp.float32)
    zeros_x = jnp.zeros((B, D), jnp.float32)
    x_packed = jnp.concatenate([
        jnp.concatenate([x0, zeros_cy], axis=1),
        jnp.concatenate([x1, zeros_cy], axis=1),
        jnp.concatenate([z, zeros_cy], axis=1),
        jnp.concatenate([zeros_x, xc, y], axis=1),
    ], axis=0)

    # W slab (8-row-aligned sections, lane width H):
    #   rows [0, K1)      : [w1x; w1c; w1y]
    #   row  K1           : w1t,   row K1+1 : b1
    #   rows [R2, R2+H)   : w2 (cols 0:D),  row R2+H : b2 (cols 0:D)
    R2 = ((K1 + 2 + 7) // 8) * 8
    n_rows = ((R2 + H + 1 + 7) // 8) * 8
    w_slab = jnp.zeros((n_rows, H), jnp.float32)
    w_slab = w_slab.at[0:D, :].set(w1x)
    w_slab = w_slab.at[D:2 * D, :].set(w1c)
    w_slab = w_slab.at[2 * D:K1, :].set(w1y)
    w_slab = w_slab.at[K1, :].set(w1t[0])
    w_slab = w_slab.at[K1 + 1, :].set(b1[0])
    w_slab = w_slab.at[R2:R2 + H, 0:D].set(w2)
    w_slab = w_slab.at[R2 + H, 0:D].set(b2[0])

    def kernel(t_ref, x_ref, w_ref, loss_ref):
        xp = x_ref[...]                              # [4B, K1]
        w1 = w_ref[0:K1, :]                          # [K1, H]
        w1t_row = w_ref[K1:K1 + 1, :]                # [1, H]
        b1_row = w_ref[K1 + 1:K1 + 2, :]             # [1, H]
        w2_v = w_ref[R2:R2 + H, 0:D]                 # [H, D]
        b2_row = w_ref[R2 + H:R2 + H + 1, 0:D]       # [1, D]

        # preprocessing.standardize == identity  # TODO(synk): plug in real standardize stats

        # ---- single layer-1 matmul produces p0, p1, pz, base for ALL MC samples ----
        l1 = jnp.dot(xp, w1, preferred_element_type=jnp.float32)    # [4B, H]
        p0 = l1[0:B, :]
        p1 = l1[B:2 * B, :]
        pz = l1[2 * B:3 * B, :]
        base = l1[3 * B:4 * B, :] + b1_row                           # xc@w1c + y@w1y + b1

        # ---- loop-invariant combines hoisted out of the MC loop ----
        w1t_b = jnp.broadcast_to(w1t_row, (B, H))    # broadcast once (JAX does not CSE it)
        h_const = p0 + base                          # t-independent part
        h_lin = (p1 - p0) + w1t_b                    # coefficient of t
        # pz is the coefficient of sigma*t*(1-t)

        ts = [t_ref[s] for s in range(num_mc)]       # scalar SMEM reads

        # ---- per-sample layer-1 combine in registers (VPU + EUP only), stacked along sublanes ----
        h_tiles = []
        for s in range(num_mc):
            t = ts[s]
            gamma = sigma * t * (1.0 - t)
            h_tiles.append(jnp.tanh(h_const + t * h_lin + gamma * pz))
        h_all = jnp.concatenate(h_tiles, axis=0)     # [num_mc*B, H], stays in vregs

        # ---- single layer-2 matmul for all MC samples ----
        bt_all = jnp.dot(h_all, w2_v, preferred_element_type=jnp.float32) + b2_row  # [num_mc*B, D]

        # ---- velocity target + squared error: accumulate, ONE reduction at the end ----
        x0v = xp[0:B, 0:D]
        x1v = xp[B:2 * B, 0:D]
        zv = xp[2 * B:3 * B, 0:D]
        dx = x1v - x0v
        acc = jnp.zeros((B, D), jnp.float32)
        for s in range(num_mc):
            t = ts[s]
            rt = dx + sigma * (1.0 - 2.0 * t) * zv
            d = bt_all[s * B:(s + 1) * B, :] - rt
            acc = acc + d * d
        loss_ref[...] = jnp.sum(acc, keepdims=True) * inv_norm

    out = pl.pallas_call(
        kernel,
        out_shape=jax.ShapeDtypeStruct((1, 1), jnp.float32),
        in_specs=[pl.BlockSpec(memory_space=pltpu.MemorySpace.SMEM),
                  pl.BlockSpec(memory_space=pltpu.MemorySpace.VMEM),
                  pl.BlockSpec(memory_space=pltpu.MemorySpace.VMEM)],
        out_specs=pl.BlockSpec(memory_space=pltpu.MemorySpace.VMEM),
    )(t_samples, x_packed, w_slab)
    return out[0, 0]


def drift_objective_ref(t_samples, x0, x1, xc, y, z, params, sigma=SIGMA):
    """Pure-JAX reference matching the PyTorch forward semantics."""
    w1x, w1c, w1y, w1t, b1, w2, b2 = params

    def per_sample(t):
        xt = (1.0 - t) * x0 + t * x1 + sigma * t * (1.0 - t) * z
        rt = (x1 - x0) + sigma * (1.0 - 2.0 * t) * z
        h = jnp.tanh(xt @ w1x + xc @ w1c + y @ w1y + t * w1t + b1)
        bt = h @ w2 + b2
        return jnp.mean((bt - rt) ** 2)

    losses = jax.vmap(per_sample)(t_samples)
    return jnp.mean(losses)


if __name__ == "__main__":
    B, D, DY, H = 8, 16, 8, 32
    NUM_MC = 4

    key = jax.random.PRNGKey(0)
    keys = jax.random.split(key, 12)

    x0 = jax.random.normal(keys[0], (B, D), jnp.float32)
    x1 = jax.random.normal(keys[1], (B, D), jnp.float32)
    xc = x0  # batch has no 'xc' -> defaults to x0
    y = jax.random.normal(keys[2], (B, DY), jnp.float32)
    z = jax.random.normal(keys[3], (B, D), jnp.float32)              # torch.randn_like(x0)
    t_samples = jax.random.uniform(keys[4], (NUM_MC,), jnp.float32)  # torch.rand(num_mc)

    # deterministic b_net parameters
    s = 0.1
    w1x = s * jax.random.normal(keys[5], (D, H), jnp.float32)
    w1c = s * jax.random.normal(keys[6], (D, H), jnp.float32)
    w1y = s * jax.random.normal(keys[7], (DY, H), jnp.float32)
    w1t = s * jax.random.normal(keys[8], (1, H), jnp.float32)
    b1 = s * jax.random.normal(keys[9], (1, H), jnp.float32)
    w2 = s * jax.random.normal(keys[10], (H, D), jnp.float32)
    b2 = s * jax.random.normal(keys[11], (1, D), jnp.float32)
    params = (w1x, w1c, w1y, w1t, b1, w2, b2)

    loss = drift_objective(t_samples, x0, x1, xc, y, z, params)
    loss = jax.block_until_ready(loss)

    loss_ref = drift_objective_ref(t_samples, x0, x1, xc, y, z, params)
    assert jnp.allclose(loss, loss_ref, rtol=1e-3, atol=1e-3), (loss, loss_ref)

    print("KERNEL_OK")
</pallas_src>

<mosaic_0001>
module attributes {stable_mosaic.version = 11 : i64} {
  func.func @kernel(%arg0: memref<4xf32, #tpu.memory_space<smem>>, %arg1: memref<32x40xf32, #tpu.memory_space<vmem>>, %arg2: memref<88x32xf32, #tpu.memory_space<vmem>>, %arg3: memref<1x1xf32, #tpu.memory_space<vmem>>) attributes {dimension_semantics = [], scalar_prefetch = 0 : i64, scratch_operands = 0 : i64, tpu.core_type = #tpu.core_type<tc>} {
    %c0 = arith.constant 0 : index
    %c0_0 = arith.constant 0 : index
    %0 = vector.load %arg1[%c0, %c0_0] : memref<32x40xf32, #tpu.memory_space<vmem>>, vector<32x40xf32>
    %c0_1 = arith.constant 0 : index
    %c0_2 = arith.constant 0 : index
    %1 = vector.load %arg2[%c0_1, %c0_2] : memref<88x32xf32, #tpu.memory_space<vmem>>, vector<40x32xf32>
    %c40 = arith.constant 40 : index
    %c0_3 = arith.constant 0 : index
    %2 = vector.load %arg2[%c40, %c0_3] : memref<88x32xf32, #tpu.memory_space<vmem>>, vector<1x32xf32>
    %c41 = arith.constant 41 : index
    %c0_4 = arith.constant 0 : index
    %3 = vector.load %arg2[%c41, %c0_4] : memref<88x32xf32, #tpu.memory_space<vmem>>, vector<1x32xf32>
    %c48 = arith.constant 48 : index
    %c0_5 = arith.constant 0 : index
    %4 = vector.load %arg2[%c48, %c0_5] : memref<88x32xf32, #tpu.memory_space<vmem>>, vector<32x16xf32>
    %c80 = arith.constant 80 : index
    %c0_6 = arith.constant 0 : index
    %5 = vector.load %arg2[%c80, %c0_6] : memref<88x32xf32, #tpu.memory_space<vmem>>, vector<1x16xf32>
    %cst = arith.constant dense<0.000000e+00> : vector<32x32xf32>
    %6 = tpu.matmul %0, %1, %cst {dimension_numbers = #tpu.dot_dimension_numbers<[1], [0], [0], [1], [0, 0, 1, 1], [], []>} : vector<32x40xf32>, vector<40x32xf32>, vector<32x32xf32> -> vector<32x32xf32>
    %7 = vector.extract_strided_slice %6 {offsets = [0, 0], sizes = [8, 32], strides = [1, 1]} : vector<32x32xf32> to vector<8x32xf32>
    %8 = vector.extract_strided_slice %6 {offsets = [8, 0], sizes = [8, 32], strides = [1, 1]} : vector<32x32xf32> to vector<8x32xf32>
    %9 = vector.extract_strided_slice %6 {offsets = [16, 0], sizes = [8, 32], strides = [1, 1]} : vector<32x32xf32> to vector<8x32xf32>
    %10 = vector.extract_strided_slice %6 {offsets = [24, 0], sizes = [8, 32], strides = [1, 1]} : vector<32x32xf32> to vector<8x32xf32>
    %11 = vector.broadcast %3 : vector<1x32xf32> to vector<8x32xf32>
    %12 = arith.addf %10, %11 : vector<8x32xf32>
    %13 = vector.shape_cast %2 : vector<1x32xf32> to vector<1x32xf32>
    %14 = vector.broadcast %13 : vector<1x32xf32> to vector<8x32xf32>
    %15 = arith.addf %7, %12 : vector<8x32xf32>
    %16 = arith.subf %8, %7 : vector<8x32xf32>
    %17 = arith.addf %16, %14 : vector<8x32xf32>
    %c0_7 = arith.constant 0 : index
    %18 = memref.load %arg0[%c0_7] : memref<4xf32, #tpu.memory_space<smem>>
    %c1 = arith.constant 1 : index
    %19 = memref.load %arg0[%c1] : memref<4xf32, #tpu.memory_space<smem>>
    %c2 = arith.constant 2 : index
    %20 = memref.load %arg0[%c2] : memref<4xf32, #tpu.memory_space<smem>>
    %c3 = arith.constant 3 : index
    %21 = memref.load %arg0[%c3] : memref<4xf32, #tpu.memory_space<smem>>
    %cst_8 = arith.constant 1.000000e+00 : f32
    %22 = arith.mulf %cst_8, %18 : f32
    %cst_9 = arith.constant 1.000000e+00 : f32
    %23 = arith.subf %cst_9, %18 : f32
    %24 = arith.mulf %22, %23 : f32
    %25 = vector.broadcast %18 : f32 to vector<8x32xf32>
    %26 = arith.mulf %25, %17 : vector<8x32xf32>
    %27 = arith.addf %15, %26 : vector<8x32xf32>
    %28 = vector.broadcast %24 : f32 to vector<8x32xf32>
    %29 = arith.mulf %28, %9 : vector<8x32xf32>
    %30 = arith.addf %27, %29 : vector<8x32xf32>
    %31 = math.tanh %30 : vector<8x32xf32>
    %cst_10 = arith.constant 1.000000e+00 : f32
    %32 = arith.mulf %cst_10, %19 : f32
    %cst_11 = arith.constant 1.000000e+00 : f32
    %33 = arith.subf %cst_11, %19 : f32
    %34 = arith.mulf %32, %33 : f32
    %35 = vector.broadcast %19 : f32 to vector<8x32xf32>
    %36 = arith.mulf %35, %17 : vector<8x32xf32>
    %37 = arith.addf %15, %36 : vector<8x32xf32>
    %38 = vector.broadcast %34 : f32 to vector<8x32xf32>
    %39 = arith.mulf %38, %9 : vector<8x32xf32>
    %40 = arith.addf %37, %39 : vector<8x32xf32>
    %41 = math.tanh %40 : vector<8x32xf32>
    %cst_12 = arith.constant 1.000000e+00 : f32
    %42 = arith.mulf %cst_12, %20 : f32
    %cst_13 = arith.constant 1.000000e+00 : f32
    %43 = arith.subf %cst_13, %20 : f32
    %44 = arith.mulf %42, %43 : f32
    %45 = vector.broadcast %20 : f32 to vector<8x32xf32>
    %46 = arith.mulf %45, %17 : vector<8x32xf32>
    %47 = arith.addf %15, %46 : vector<8x32xf32>
    %48 = vector.broadcast %44 : f32 to vector<8x32xf32>
    %49 = arith.mulf %48, %9 : vector<8x32xf32>
    %50 = arith.addf %47, %49 : vector<8x32xf32>
    %51 = math.tanh %50 : vector<8x32xf32>
    %cst_14 = arith.constant 1.000000e+00 : f32
    %52 = arith.mulf %cst_14, %21 : f32
    %cst_15 = arith.constant 1.000000e+00 : f32
    %53 = arith.subf %cst_15, %21 : f32
    %54 = arith.mulf %52, %53 : f32
    %55 = vector.broadcast %21 : f32 to vector<8x32xf32>
    %56 = arith.mulf %55, %17 : vector<8x32xf32>
    %57 = arith.addf %15, %56 : vector<8x32xf32>
    %58 = vector.broadcast %54 : f32 to vector<8x32xf32>
    %59 = arith.mulf %58, %9 : vector<8x32xf32>
    %60 = arith.addf %57, %59 : vector<8x32xf32>
    %61 = math.tanh %60 : vector<8x32xf32>
    %62 = tpu.concatenate %31, %41, %51, %61 in 0 : vector<8x32xf32>, vector<8x32xf32>, vector<8x32xf32>, vector<8x32xf32> -> vector<32x32xf32>
    %cst_16 = arith.constant dense<0.000000e+00> : vector<32x16xf32>
    %63 = tpu.matmul %62, %4, %cst_16 {dimension_numbers = #tpu.dot_dimension_numbers<[1], [0], [0], [1], [0, 0, 1, 1], [], []>} : vector<32x32xf32>, vector<32x16xf32>, vector<32x16xf32> -> vector<32x16xf32>
    %64 = vector.broadcast %5 : vector<1x16xf32> to vector<32x16xf32>
    %65 = arith.addf %63, %64 : vector<32x16xf32>
    %66 = vector.extract_strided_slice %0 {offsets = [0, 0], sizes = [8, 16], strides = [1, 1]} : vector<32x40xf32> to vector<8x16xf32>
    %67 = vector.extract_strided_slice %0 {offsets = [8, 0], sizes = [8, 16], strides = [1, 1]} : vector<32x40xf32> to vector<8x16xf32>
    %68 = vector.extract_strided_slice %0 {offsets = [16, 0], sizes = [8, 16], strides = [1, 1]} : vector<32x40xf32> to vector<8x16xf32>
    %69 = arith.subf %67, %66 : vector<8x16xf32>
    %cst_17 = arith.constant 0.000000e+00 : f32
    %70 = vector.broadcast %cst_17 : f32 to vector<8x16xf32>
    %cst_18 = arith.constant 2.000000e+00 : f32
    %71 = arith.mulf %cst_18, %18 : f32
    %cst_19 = arith.constant 1.000000e+00 : f32
    %72 = arith.subf %cst_19, %71 : f32
    %cst_20 = arith.constant 1.000000e+00 : f32
    %73 = arith.mulf %cst_20, %72 : f32
    %74 = vector.broadcast %73 : f32 to vector<8x16xf32>
    %75 = arith.mulf %74, %68 : vector<8x16xf32>
    %76 = arith.addf %69, %75 : vector<8x16xf32>
    %77 = vector.extract_strided_slice %65 {offsets = [0, 0], sizes = [8, 16], strides = [1, 1]} : vector<32x16xf32> to vector<8x16xf32>
    %78 = arith.subf %77, %76 : vector<8x16xf32>
    %79 = arith.mulf %78, %78 : vector<8x16xf32>
    %80 = arith.addf %70, %79 : vector<8x16xf32>
    %cst_21 = arith.constant 2.000000e+00 : f32
    %81 = arith.mulf %cst_21, %19 : f32
    %cst_22 = arith.constant 1.000000e+00 : f32
    %82 = arith.subf %cst_22, %81 : f32
    %cst_23 = arith.constant 1.000000e+00 : f32
    %83 = arith.mulf %cst_23, %82 : f32
    %84 = vector.broadcast %83 : f32 to vector<8x16xf32>
    %85 = arith.mulf %84, %68 : vector<8x16xf32>
    %86 = arith.addf %69, %85 : vector<8x16xf32>
    %87 = vector.extract_strided_slice %65 {offsets = [8, 0], sizes = [8, 16], strides = [1, 1]} : vector<32x16xf32> to vector<8x16xf32>
    %88 = arith.subf %87, %86 : vector<8x16xf32>
    %89 = arith.mulf %88, %88 : vector<8x16xf32>
    %90 = arith.addf %80, %89 : vector<8x16xf32>
    %cst_24 = arith.constant 2.000000e+00 : f32
    %91 = arith.mulf %cst_24, %20 : f32
    %cst_25 = arith.constant 1.000000e+00 : f32
    %92 = arith.subf %cst_25, %91 : f32
    %cst_26 = arith.constant 1.000000e+00 : f32
    %93 = arith.mulf %cst_26, %92 : f32
    %94 = vector.broadcast %93 : f32 to vector<8x16xf32>
    %95 = arith.mulf %94, %68 : vector<8x16xf32>
    %96 = arith.addf %69, %95 : vector<8x16xf32>
    %97 = vector.extract_strided_slice %65 {offsets = [16, 0], sizes = [8, 16], strides = [1, 1]} : vector<32x16xf32> to vector<8x16xf32>
    %98 = arith.subf %97, %96 : vector<8x16xf32>
    %99 = arith.mulf %98, %98 : vector<8x16xf32>
    %100 = arith.addf %90, %99 : vector<8x16xf32>
    %cst_27 = arith.constant 2.000000e+00 : f32
    %101 = arith.mulf %cst_27, %21 : f32
    %cst_28 = arith.constant 1.000000e+00 : f32
    %102 = arith.subf %cst_28, %101 : f32
    %cst_29 = arith.constant 1.000000e+00 : f32
    %103 = arith.mulf %cst_29, %102 : f32
    %104 = vector.broadcast %103 : f32 to vector<8x16xf32>
    %105 = arith.mulf %104, %68 : vector<8x16xf32>
    %106 = arith.addf %69, %105 : vector<8x16xf32>
    %107 = vector.extract_strided_slice %65 {offsets = [24, 0], sizes = [8, 16], strides = [1, 1]} : vector<32x16xf32> to vector<8x16xf32>
    %108 = arith.subf %107, %106 : vector<8x16xf32>
    %109 = arith.mulf %108, %108 : vector<8x16xf32>
    %110 = arith.addf %100, %109 : vector<8x16xf32>
    %111 = vector.shape_cast %110 : vector<8x16xf32> to vector<1x8x16xf32>
    %cst_30 = arith.constant dense<0.000000e+00> : vector<1xf32>
    %112 = vector.multi_reduction <add>, %111, %cst_30 [1, 2] : vector<1x8x16xf32> to vector<1xf32>
    %113 = vector.shape_cast %112 : vector<1xf32> to vector<1x1x1xf32>
    %114 = vector.extract %113[0, 0, 0] : f32 from vector<1x1x1xf32>
    %115 = vector.broadcast %114 : f32 to vector<1x1xf32>
    %cst_31 = arith.constant 0.001953125 : f32
    %116 = vector.broadcast %cst_31 : f32 to vector<1x1xf32>
    %117 = arith.mulf %115, %116 : vector<1x1xf32>
    %c0_32 = arith.constant 0 : index
    %c0_33 = arith.constant 0 : index
    %118 = vector.load %arg3[%c0_32, %c0_33] : memref<1x1xf32, #tpu.memory_space<vmem>>, vector<1x1xf32>
    tpu.vector_store %arg3[%c0_32, %c0_33], %117 {strides = array<i32>} : memref<1x1xf32, #tpu.memory_space<vmem>>, vector<1x1xf32>,
    return
  }
}

</mosaic_0001>

<llo_original>
// kernel: tpu_custom_call.1
$region0: #{tpu_custom_call.1}
  #allocation0 [shape = 'u32[]', space=smem, size = 0x4, offset = 0x4, fixed_abs, tag = 'smem constant byte address 0x4 - core index']
  #allocation1 [shape = 'u32[144,128]{1,0:T(1,128)}', space=vmem, size = 0x12000, scoped, tag = 'internal scratch']
  %s0 = inlined_call_operand.vmem [shape: f32[4], index: 0, kind: input, shape index: {}]
  %s1 = inlined_call_operand.vmem [shape: f32[32,40], index: 1, kind: input, shape index: {}]
  %s2 = inlined_call_operand.vmem [shape: f32[88,32], index: 2, kind: input, shape index: {}]
  %s3 = inlined_call_operand.hbm [shape: f32[1,1], index: 3, kind: output, shape index: {}]
  %s4 = sld [smem:[#allocation0]]
  $region26: #{tpu_custom_call.1} parent=0
    _
  %s6 = ssub.s32 1, %s4
  %s7 = scalar_select 0, %s6, %s4
  $region1: #{tpu_custom_call.1} parent=0
    #allocation2 [shape = 'u8[512]{0}', space=smem, size = 0x200, scoped, tag = 'input window, operand 0, single buffered']
    #allocation3 [shape = 's32[1]{0}', space=sflag, size = 0x4, scoped, tag = 'scoped memory for tpu_custom_call.1']
    #allocation4 [shape = 's32[1]{0}', space=sflag, size = 0x4, scoped, tag = 'scoped memory for tpu_custom_call.1']
    #allocation5 [shape = 'u8[512]{0}', space=vmem, size = 0x400, scoped, tag = 'output window, operand 0, single buffered']
    %8 = vsyncpa [#allocation4], 0
    %9 = vsyncpa [#allocation3], 0
    // Predicated region
    $region2: #{tpu_custom_call.1} parent=1 // pred_check
      _
    $region3: #{tpu_custom_call.1} parent=1 // pred_check_branch
      %11 = sbr.rel (0) target = $region5
    $region4: #{tpu_custom_call.1} parent=1 // pred_region
      %s13 = ssub.s32 16, 16
      %14 = vsyncadd [#allocation4], %s13
      %s16 = sshll.u32 %s0, 4
      %s17 = int_to_ptr.vmem [resolvable:$true] %s16
      %19 = dma.vmem_to_smem %s17, 16, [#allocation2], [#allocation4]
    $region5: #{tpu_custom_call.1} parent=1 // pred_fallthru
      _
    // Predicated region
    $region6: #{tpu_custom_call.1} parent=1 // pred_check
      _
    $region7: #{tpu_custom_call.1} parent=1 // pred_check_branch
      %21 = sbr.rel (0) target = $region9
    $region8: #{tpu_custom_call.1} parent=1 // pred_region
      _
    $region9: #{tpu_custom_call.1} parent=1 // pred_fallthru
      _
    // Predicated region
    $region10: #{tpu_custom_call.1} parent=1 // pred_check
      _
    $region11: #{tpu_custom_call.1} parent=1 // pred_check_branch
      %23 = sbr.rel (0) target = $region13
    $region12: #{tpu_custom_call.1} parent=1 // pred_region
      _
    $region13: #{tpu_custom_call.1} parent=1 // pred_fallthru
      _
    // Predicated region
    $region14: #{tpu_custom_call.1} parent=1 // pred_check
      _
    $region15: #{tpu_custom_call.1} parent=1 // pred_check_branch
      %25 = sbr.rel (0) target = $region17
    $region16: #{tpu_custom_call.1} parent=1 // pred_region
      %26 = dma.done [#allocation4], 16
    $region17: #{tpu_custom_call.1} parent=1 // pred_fallthru
      _
    %27 = sfence
    %v28 = vld [vmem:[%s1] sm:$0xff]
    %v29 = vld [vmem:[%s1 + $0x8] sm:$0xff]
    %v30 = vld [vmem:[%s1 + $0x10] sm:$0xff]
    %v31 = vld [vmem:[%s1 + $0x18] sm:$0xff]
    %v32 = vld [vmem:[%s2] sm:$0xff]
    %v33 = vld [vmem:[%s2 + $0x8] sm:$0xff]
    %v34 = vld [vmem:[%s2 + $0x10] sm:$0xff]
    %v35 = vld [vmem:[%s2 + $0x18] sm:$0xff]
    %v36 = vld [vmem:[%s2 + $0x20] sm:$0xff]
    %v37 = vld [vmem:[%s2 + $0x28] sm:$0x1]
    %v38 = vld [vmem:[%s2 + $0x29] sm:$0x1]
    %v39 = vld [vmem:[%s2 + $0x30] sm:$0xff]
    %v40 = vld [vmem:[%s2 + $0x38] sm:$0xff]
    %v41 = vld [vmem:[%s2 + $0x40] sm:$0xff]
    %v42 = vld [vmem:[%s2 + $0x48] sm:$0xff]
    %v43 = vld [vmem:[%s2 + $0x50] sm:$0x1]
    %vm44 = vcmask 326656
    %v46 = vsel %vm44, %v28, 0
    %v49 = vsel %vm44, %v29, 0
    %v52 = vsel %vm44, %v30, 0
    %v55 = vsel %vm44, %v31, 0
    %57 = vmatprep.subr.mxu0 0.0
    %58 = vmatpush1.msra.mxu0 0.0
    %59 = vmatprep.subr.mxu0 0.0
    %60 = vmatpush1.msra.mxu0 0.0
    %61 = vmatprep.subr.mxu0 0.0
    %62 = vmatpush1.msra.mxu0 0.0
    %63 = vmatprep.subr.mxu0 0.0
    %64 = vmatpush1.msra.mxu0 0.0
    %65 = vmatprep.subr.mxu0 0.0
    %66 = vmatpush1.msra.mxu0 0.0
    %67 = vmatprep.subr.mxu0 0.0
    %68 = vmatpush1.msra.mxu0 0.0
    %69 = vmatprep.subr.mxu0 0.0
    %70 = vmatpush1.msra.mxu0 0.0
    %71 = vmatprep.subr.mxu0 0.0
    %72 = vmatpush1.msra.mxu0 0.0
    %73 = vmatprep.subr.mxu0 0.0
    %74 = vmatpush1.msra.mxu0 0.0
    %75 = vmatprep.subr.mxu0 0.0
    %76 = vmatpush1.msra.mxu0 0.0
    %77 = vmatprep.subr.mxu0 0.0
    %78 = vmatpush1.msra.mxu0 0.0
    %79 = vmatprep.subr.mxu0 0.0
    %80 = vmatpush1.msra.mxu0 %v36
    %81 = vmatprep.subr.mxu0 0.0
    %82 = vmatpush1.msra.mxu0 %v35
    %83 = vmatprep.subr.mxu0 0.0
    %84 = vmatpush1.msra.mxu0 %v34
    %85 = vmatprep.subr.mxu0 0.0
    %86 = vmatpush1.msra.mxu0 %v33
    %87 = vmatprep.subr.mxu0 0.0
    %88 = vmatpush1.msra.mxu0 %v32
    %89 = vmatprep.subr.mxu0 0.0
    %90 = vmatpush2.msra.mxu0 0.0
    %91 = vmatprep.subr.mxu0 0.0
    %92 = vmatpush2.msra.mxu0 0.0
    %93 = vmatprep.subr.mxu0 0.0
    %94 = vmatpush2.msra.mxu0 0.0
    %95 = vmatprep.subr.mxu0 0.0
    %96 = vmatpush2.msra.mxu0 0.0
    %97 = vmatprep.subr.mxu0 0.0
    %98 = vmatpush2.msra.mxu0 0.0
    %99 = vmatprep.subr.mxu0 0.0
    %100 = vmatpush2.msra.mxu0 0.0
    %101 = vmatprep.subr.mxu0 0.0
    %102 = vmatpush2.msra.mxu0 0.0
    %103 = vmatprep.subr.mxu0 0.0
    %104 = vmatpush2.msra.mxu0 0.0
    %105 = vmatprep.subr.mxu0 0.0
    %106 = vmatpush2.msra.mxu0 0.0
    %107 = vmatprep.subr.mxu0 0.0
    %108 = vmatpush2.msra.mxu0 0.0
    %109 = vmatprep.subr.mxu0 0.0
    %110 = vmatpush2.msra.mxu0 0.0
    %111 = vmatprep.subr.mxu0 0.0
    %112 = vmatpush2.msra.mxu0 0.0
    %113 = vmatprep.subr.mxu0 0.0
    %114 = vmatpush2.msra.mxu0 0.0
    %115 = vmatprep.subr.mxu0 0.0
    %116 = vmatpush2.msra.mxu0 0.0
    %117 = vmatprep.subr.mxu0 0.0
    %118 = vmatpush2.msra.mxu0 0.0
    %119 = vmatprep.subr.mxu0 0.0
    %120 = vmatpush2.msra.mxu0 0.0
    %121 = vmatprep.mubr.f32.mxu0 0.0
    %122 = vmatmul.mubr.f32.gmra.mxu0 %v46
    %v123 = vpop.f32.mrf.mxu0
    %v124 = vadd.f32 0.0, %v123
    %v125 = vpop.f32.mrf.mxu0
    %126 = vmatprep.mubr.f32.mxu0 0.0
    %127 = vmatmul.mubr.f32.gmra.mxu0 %v49
    %v128 = vpop.f32.mrf.mxu0
    %v129 = vadd.f32 0.0, %v128
    %v130 = vpop.f32.mrf.mxu0
    %131 = vmatprep.mubr.f32.mxu0 0.0
    %132 = vmatmul.mubr.f32.gmra.mxu0 %v52
    %v133 = vpop.f32.mrf.mxu0
    %v134 = vadd.f32 0.0, %v133
    %v135 = vpop.f32.mrf.mxu0
    %136 = vmatprep.mubr.f32.mxu0 0.0
    %137 = vmatmul.mubr.f32.gmra.mxu0 %v55
    %v138 = vpop.f32.mrf.mxu0
    %v139 = vadd.f32 0.0, %v138
    %v140 = vpop.f32.mrf.mxu0
    %141 = vdwg.mxu0
    %v142 = vlaneseq
    %v143 = vshrl.u32 %v142, 7
    %v144 = vsub.s32 0, %v143
    %v145 = vrot.slane %v38, %v144
    %v146 = vadd.f32 %v139, %v145
    %v147 = vlaneseq
    %v148 = vshrl.u32 %v147, 7
    %v149 = vsub.s32 0, %v148
    %v150 = vrot.slane %v37, %v149
    %v151 = vadd.f32 %v124, %v146
    %v152 = vsub.f32 %v129, %v124
    %v153 = vadd.f32 %v152, %v150
    %s154 = sld [smem:[#allocation2]]
    %s155 = sld [smem:[#allocation2 + $0x1]]
    %s156 = sld [smem:[#allocation2 + $0x2]]
    %s157 = sld [smem:[#allocation2 + $0x3]]
    %s158 = ssub.f32 1.0, %s154
    %s159 = smul.f32 %s154, %s158
    %v160 = vstv %s154
    %v161 = vmul.f32 %v160, %v153
    %v162 = vadd.f32 %v151, %v161
    %v163 = vstv %s159
    %v164 = vmul.f32 %v163, %v134
    %v165 = vadd.f32 %v162, %v164
    %v166 = vtanh.pop %v165
    %s167 = ssub.f32 1.0, %s155
    %s168 = smul.f32 %s155, %s167
    %v169 = vstv %s155
    %v170 = vmul.f32 %v169, %v153
    %v171 = vadd.f32 %v151, %v170
    %v172 = vstv %s168
    %v173 = vmul.f32 %v172, %v134
    %v174 = vadd.f32 %v171, %v173
    %v175 = vtanh.pop %v174
    %s176 = ssub.f32 1.0, %s156
    %s177 = smul.f32 %s156, %s176
    %v178 = vstv %s156
    %v179 = vmul.f32 %v178, %v153
    %v180 = vadd.f32 %v151, %v179
    %v181 = vstv %s177
    %v182 = vmul.f32 %v181, %v134
    %v183 = vadd.f32 %v180, %v182
    %v184 = vtanh.pop %v183
    %s185 = ssub.f32 1.0, %s157
    %s186 = smul.f32 %s157, %s185
    %v187 = vstv %s157
    %v188 = vmul.f32 %v187, %v153
    %v189 = vadd.f32 %v151, %v188
    %v190 = vstv %s186
    %v191 = vmul.f32 %v190, %v134
    %v192 = vadd.f32 %v189, %v191
    %v193 = vtanh.pop %v192
    %v194 = vlaneseq
    %v195 = vshrl.u32 %v194, 7
    %v196 = vsub.s32 0, %v195
    %v197 = vrot.slane %v43, %v196
    %vm198 = vcmask 261120
    %v200 = vsel %vm198, %v166, 0
    %v203 = vsel %vm198, %v175, 0
    %v206 = vsel %vm198, %v184, 0
    %v209 = vsel %vm198, %v193, 0
    %211 = vmatprep.subr.mxu0 0.0
    %212 = vmatpush1.msra.mxu0 0.0
    %213 = vmatprep.subr.mxu0 0.0
    %214 = vmatpush1.msra.mxu0 0.0
    %215 = vmatprep.subr.mxu0 0.0
    %216 = vmatpush1.msra.mxu0 0.0
    %217 = vmatprep.subr.mxu0 0.0
    %218 = vmatpush1.msra.mxu0 0.0
    %219 = vmatprep.subr.mxu0 0.0
    %220 = vmatpush1.msra.mxu0 0.0
    %221 = vmatprep.subr.mxu0 0.0
    %222 = vmatpush1.msra.mxu0 0.0
    %223 = vmatprep.subr.mxu0 0.0
    %224 = vmatpush1.msra.mxu0 0.0
    %225 = vmatprep.subr.mxu0 0.0
    %226 = vmatpush1.msra.mxu0 0.0
    %227 = vmatprep.subr.mxu0 0.0
    %228 = vmatpush1.msra.mxu0 0.0
    %229 = vmatprep.subr.mxu0 0.0
    %230 = vmatpush1.msra.mxu0 0.0
    %231 = vmatprep.subr.mxu0 0.0
    %232 = vmatpush1.msra.mxu0 0.0
    %233 = vmatprep.subr.mxu0 0.0
    %234 = vmatpush1.msra.mxu0 0.0
    %235 = vmatprep.subr.mxu0 0.0
    %236 = vmatpush1.msra.mxu0 %v42
    %237 = vmatprep.subr.mxu0 0.0
    %238 = vmatpush1.msra.mxu0 %v41
    %239 = vmatprep.subr.mxu0 0.0
    %240 = vmatpush1.msra.mxu0 %v40
    %241 = vmatprep.subr.mxu0 0.0
    %242 = vmatpush1.msra.mxu0 %v39
    %243 = vmatprep.subr.mxu0 0.0
    %244 = vmatpush2.msra.mxu0 0.0
    %245 = vmatprep.subr.mxu0 0.0
    %246 = vmatpush2.msra.mxu0 0.0
    %247 = vmatprep.subr.mxu0 0.0
    %248 = vmatpush2.msra.mxu0 0.0
    %249 = vmatprep.subr.mxu0 0.0
    %250 = vmatpush2.msra.mxu0 0.0
    %251 = vmatprep.subr.mxu0 0.0
    %252 = vmatpush2.msra.mxu0 0.0
    %253 = vmatprep.subr.mxu0 0.0
    %254 = vmatpush2.msra.mxu0 0.0
    %255 = vmatprep.subr.mxu0 0.0
    %256 = vmatpush2.msra.mxu0 0.0
    %257 = vmatprep.subr.mxu0 0.0
    %258 = vmatpush2.msra.mxu0 0.0
    %259 = vmatprep.subr.mxu0 0.0
    %260 = vmatpush2.msra.mxu0 0.0
    %261 = vmatprep.subr.mxu0 0.0
    %262 = vmatpush2.msra.mxu0 0.0
    %263 = vmatprep.subr.mxu0 0.0
    %264 = vmatpush2.msra.mxu0 0.0
    %265 = vmatprep.subr.mxu0 0.0
    %266 = vmatpush2.msra.mxu0 0.0
    %267 = vmatprep.subr.mxu0 0.0
    %268 = vmatpush2.msra.mxu0 0.0
    %269 = vmatprep.subr.mxu0 0.0
    %270 = vmatpush2.msra.mxu0 0.0
    %271 = vmatprep.subr.mxu0 0.0
    %272 = vmatpush2.msra.mxu0 0.0
    %273 = vmatprep.subr.mxu0 0.0
    %274 = vmatpush2.msra.mxu0 0.0
    %275 = vmatprep.mubr.f32.mxu0 0.0
    %276 = vmatmul.mubr.f32.gmra.mxu0 %v200
    %v277 = vpop.f32.mrf.mxu0
    %v278 = vadd.f32 %v197, %v277
    %v279 = vpop.f32.mrf.mxu0
    %280 = vmatprep.mubr.f32.mxu0 0.0
    %281 = vmatmul.mubr.f32.gmra.mxu0 %v203
    %v282 = vpop.f32.mrf.mxu0
    %v283 = vadd.f32 %v197, %v282
    %v284 = vpop.f32.mrf.mxu0
    %285 = vmatprep.mubr.f32.mxu0 0.0
    %286 = vmatmul.mubr.f32.gmra.mxu0 %v206
    %v287 = vpop.f32.mrf.mxu0
    %v288 = vadd.f32 %v197, %v287
    %v289 = vpop.f32.mrf.mxu0
    %290 = vmatprep.mubr.f32.mxu0 0.0
    %291 = vmatmul.mubr.f32.gmra.mxu0 %v209
    %v292 = vpop.f32.mrf.mxu0
    %v293 = vadd.f32 %v197, %v292
    %v294 = vpop.f32.mrf.mxu0
    %295 = vdwg.mxu0
    %v296 = vsub.f32 %v29, %v28
    %s297 = smul.f32 %s154, 2.0
    %s298 = ssub.f32 1.0, %s297
    %v299 = vstv %s298
    %v300 = vmul.f32 %v299, %v30
    %v301 = vadd.f32 %v296, %v300
    %v302 = vsub.f32 %v278, %v301
    %v303 = vmul.f32 %v302, %v302
    %v304 = vadd.f32 %v303, 0.0
    %s305 = smul.f32 %s155, 2.0
    %s306 = ssub.f32 1.0, %s305
    %v307 = vstv %s306
    %v308 = vmul.f32 %v307, %v30
    %v309 = vadd.f32 %v296, %v308
    %v310 = vsub.f32 %v283, %v309
    %v311 = vmul.f32 %v310, %v310
    %v312 = vadd.f32 %v304, %v311
    %s313 = smul.f32 %s156, 2.0
    %s314 = ssub.f32 1.0, %s313
    %v315 = vstv %s314
    %v316 = vmul.f32 %v315, %v30
    %v317 = vadd.f32 %v296, %v316
    %v318 = vsub.f32 %v288, %v317
    %v319 = vmul.f32 %v318, %v318
    %v320 = vadd.f32 %v312, %v319
    %s321 = smul.f32 %s157, 2.0
    %s322 = ssub.f32 1.0, %s321
    %v323 = vstv %s322
    %v324 = vmul.f32 %v323, %v30
    %v325 = vadd.f32 %v296, %v324
    %v326 = vsub.f32 %v293, %v325
    %v327 = vmul.f32 %v326, %v326
    %v328 = vadd.f32 %v320, %v327
    %vm329 = vcmask 130048
    %v330 = vsel %vm329, %v328, 0.0
    %331 = vadd.xlane.f32.xlu0 %v330
    %v332 = vpop.xlane.xlu0 %331
    %v333 = vrot.slane %v332, 4
    %v334 = vadd.f32 %v332, %v333
    %v335 = vrot.slane %v334, 2
    %v336 = vadd.f32 %v334, %v335
    %v337 = vrot.slane %v336, 1
    %v338 = vadd.f32 %v336, %v337
    %s339 = vtos %v338
    %v340 = vstv %s339
    %v341 = vmul.f32 %v340, 0.001953125
    %vm342 = vcmask 0
    %343 = vst.msk [vmem:[#allocation5] sm:$0x1] %vm342, %v341
    // Predicated region
    $region18: #{tpu_custom_call.1} parent=1 // pred_check
      _
    $region19: #{tpu_custom_call.1} parent=1 // pred_check_branch
      %345 = sbr.rel (0) target = $region21
    $region20: #{tpu_custom_call.1} parent=1 // pred_region
      %s347 = ssub.s32 16, 16
      %348 = vsyncadd [#allocation3], %s347
      %s350 = sshll.u32 [#allocation5], 4
      %s351 = int_to_ptr.vmem [resolvable:$true] %s350
      %353 = dma.vmem_to_hbm [thread:$0]  %s351, 16, %s3, [#allocation3]
    $region21: #{tpu_custom_call.1} parent=1 // pred_fallthru
      _
    // Predicated region
    $region22: #{tpu_custom_call.1} parent=1 // pred_check
      _
    $region23: #{tpu_custom_call.1} parent=1 // pred_check_branch
      %355 = sbr.rel (0) target = $region25
    $region24: #{tpu_custom_call.1} parent=1 // pred_region
      %356 = dma.done [#allocation3], 16
    $region25: #{tpu_custom_call.1} parent=1 // pred_fallthru
      _
    %357 = vsyncpa [#allocation3], 1
    %358 = vsyncpa [#allocation4], 1

</llo_original>
